<compile_context>
chip_gen: v7x
topology: tpu7x:2x2x1
jax: 0.10.0
libtpu: 0.0.40
codegen_flags: <defaults>
</compile_context>

<pallas_src>
import math
from functools import partial

import jax
import jax.numpy as jnp
from jax import lax
from jax.experimental import pallas as pl
from jax.experimental.pallas import tpu as pltpu

LANE = 128
SUBLANE = 8
VMEM_LIMIT = 48 * 1024 * 1024  # > 32 MiB scoped default (v6e), within v7x 64 MiB


def _round_up(x, m):
    return (x + m - 1) // m * m


def _choose_tq(nq):
    """Query row tile: whole (8-padded) sequence if small, else 256 rows."""
    nq8 = _round_up(nq, SUBLANE)
    return nq8 if nq8 <= 256 else 256


# ---------------------------------------------------------------------------
# Fused kernel: one (batch, query-tile) grid step does
#   kp/vp projection (once per batch, into VMEM scratch),
#   qp projection, scores, softmax, attn@vp, output projection.
# Weights arrive pre-transposed / pre-scaled / bf16; biases stay f32.
# ---------------------------------------------------------------------------
def _fused_attn_kernel(q_ref, k_ref, v_ref,
                       wtq_ref, wtk_ref, wtv_ref, wto_ref,
                       bq_ref, bk_ref, bv_ref, bo_ref,
                       o_ref,
                       kp_sc, vp_sc,
                       *, nk_valid):
    qi = pl.program_id(1)

    # K/V projections: compute once per batch element, persist in bf16 scratch.
    @pl.when(qi == 0)
    def _():
        kb = k_ref[0]                                        # (Nk_p, Ep) bf16
        vb = v_ref[0]
        kp = jnp.dot(kb, wtk_ref[...], preferred_element_type=jnp.float32) + bk_ref[...]
        vp = jnp.dot(vb, wtv_ref[...], preferred_element_type=jnp.float32) + bv_ref[...]
        kp_sc[...] = kp.astype(jnp.bfloat16)
        vp_sc[...] = vp.astype(jnp.bfloat16)

    # Q projection (1/sqrt(E) already folded into wtq / bq by the wrapper).
    qb = q_ref[0]                                            # (tq, Ep) bf16
    qp = (jnp.dot(qb, wtq_ref[...], preferred_element_type=jnp.float32)
          + bq_ref[...]).astype(jnp.bfloat16)

    # Scores: contract on E directly (no materialized kp.T), f32 accumulation.
    scores = lax.dot_general(
        qp, kp_sc[...],
        dimension_numbers=(((1,), (1,)), ((), ())),
        preferred_element_type=jnp.float32)                  # (tq, Nk_p)

    nk_p = scores.shape[-1]
    if nk_valid < nk_p:  # static check: mask zero-padded key positions
        col = lax.broadcasted_iota(jnp.int32, scores.shape, 1)
        scores = jnp.where(col < nk_valid, scores, -jnp.inf)

    # Softmax in f32; reciprocal on the EUP slot.
    m = jnp.max(scores, axis=-1, keepdims=True)
    p = jnp.exp(scores - m)
    denom = jnp.sum(p, axis=-1, keepdims=True)
    p = p * pl.reciprocal(denom, approx=True)

    attn = jnp.dot(p.astype(jnp.bfloat16), vp_sc[...],
                   preferred_element_type=jnp.float32)       # (tq, Ep)

    out = jnp.dot(attn.astype(jnp.bfloat16), wto_ref[...],
                  preferred_element_type=jnp.float32) + bo_ref[...]
    o_ref[0] = out.astype(o_ref.dtype)


# ---------------------------------------------------------------------------
# Full module forward.
# ---------------------------------------------------------------------------
def attention_pallas(q, k, v, params):
    """q: (B, Nq, E), k/v: (B, Nk, E). Returns (B, Nq, E)."""
    wq, bq, wk, bk, wv, bv, wo, bo = params
    B, Nq, E = q.shape
    _, Nk, _ = k.shape
    scale = 1.0 / math.sqrt(E)

    Ep = _round_up(E, LANE)            # lane-dense feature padding
    Nk_p = _round_up(Nk, SUBLANE)
    tq = _choose_tq(Nq)
    Nq_p = _round_up(Nq, tq)
    n_qt = Nq_p // tq

    # Weights: transpose, fold softmax scale into Wq/bq, zero-pad, pre-cast bf16.
    def prep_w(w, s=1.0):
        wt = (w.T * s).astype(jnp.bfloat16)                  # (in, out) = W^T
        return jnp.pad(wt, ((0, Ep - E), (0, Ep - E)))

    def prep_b(bias, s=1.0):
        return jnp.pad(bias * s, (0, Ep - E)).reshape(1, Ep).astype(jnp.float32)

    wtq, wtk, wtv, wto = prep_w(wq, scale), prep_w(wk), prep_w(wv), prep_w(wo)
    bqp, bkp, bvp, bop = prep_b(bq, scale), prep_b(bk), prep_b(bv), prep_b(bo)

    # Activations: zero-pad + pre-cast to bf16 (kernel consumed them as bf16 anyway).
    def pad_seq(x, n_pad):
        return jnp.pad(
            x, ((0, 0), (0, n_pad - x.shape[1]), (0, Ep - E))).astype(jnp.bfloat16)

    q_pad = pad_seq(q, Nq_p)
    k_pad = pad_seq(k, Nk_p)
    v_pad = pad_seq(v, Nk_p)

    flops = (2 * B * Ep * Ep * (Nq_p + 2 * Nk_p)             # q/k/v projections
             + 4 * B * Nq_p * Nk_p * Ep                      # scores + attn@v
             + 2 * B * Nq_p * Ep * Ep)                       # output projection
    bytes_accessed = (2 * (q_pad.size + k_pad.size + v_pad.size)
                      + 2 * 4 * Ep * Ep + 4 * 4 * Ep
                      + 4 * B * Nq_p * Ep)

    out = pl.pallas_call(
        partial(_fused_attn_kernel, nk_valid=Nk),
        out_shape=jax.ShapeDtypeStruct((B, Nq_p, Ep), q.dtype),
        grid_spec=pltpu.PrefetchScalarGridSpec(
            num_scalar_prefetch=0,
            grid=(B, n_qt),
            in_specs=[
                pl.BlockSpec((1, tq, Ep), lambda b, qi: (b, qi, 0)),     # q
                pl.BlockSpec((1, Nk_p, Ep), lambda b, qi: (b, 0, 0)),    # k
                pl.BlockSpec((1, Nk_p, Ep), lambda b, qi: (b, 0, 0)),    # v
                # Grid-invariant bf16 weights (could be pipeline_mode=pl.Buffered(1)
                # to drop one copy on v7x; kept default for portability).
                pl.BlockSpec((Ep, Ep), lambda b, qi: (0, 0)),            # Wq^T*scale
                pl.BlockSpec((Ep, Ep), lambda b, qi: (0, 0)),            # Wk^T
                pl.BlockSpec((Ep, Ep), lambda b, qi: (0, 0)),            # Wv^T
                pl.BlockSpec((Ep, Ep), lambda b, qi: (0, 0)),            # Wo^T
                pl.BlockSpec((1, Ep), lambda b, qi: (0, 0)),             # bq*scale
                pl.BlockSpec((1, Ep), lambda b, qi: (0, 0)),             # bk
                pl.BlockSpec((1, Ep), lambda b, qi: (0, 0)),             # bv
                pl.BlockSpec((1, Ep), lambda b, qi: (0, 0)),             # bo
            ],
            out_specs=pl.BlockSpec((1, tq, Ep), lambda b, qi: (b, qi, 0)),
            scratch_shapes=[
                pltpu.VMEM((Nk_p, Ep), jnp.bfloat16),   # kp (per-batch resident)
                pltpu.VMEM((Nk_p, Ep), jnp.bfloat16),   # vp
            ],
        ),
        compiler_params=pltpu.CompilerParams(
            dimension_semantics=("parallel", "arbitrary"),
            vmem_limit_bytes=VMEM_LIMIT,
        ),
        cost_estimate=pl.CostEstimate(
            flops=int(flops),
            transcendentals=int(B * Nq_p * Nk_p),
            bytes_accessed=int(bytes_accessed)),
    )(q_pad, k_pad, v_pad, wtq, wtk, wtv, wto, bqp, bkp, bvp, bop)

    return out[:, :Nq, :E]


def init_params(key, embedding_dim):
    E = embedding_dim
    keys = jax.random.split(key, 8)
    scale = 1.0 / math.sqrt(E)
    wq = jax.random.uniform(keys[0], (E, E), jnp.float32, -scale, scale)
    bq = jax.random.uniform(keys[1], (E,), jnp.float32, -scale, scale)
    wk = jax.random.uniform(keys[2], (E, E), jnp.float32, -scale, scale)
    bk = jax.random.uniform(keys[3], (E,), jnp.float32, -scale, scale)
    wv = jax.random.uniform(keys[4], (E, E), jnp.float32, -scale, scale)
    bv = jax.random.uniform(keys[5], (E,), jnp.float32, -scale, scale)
    wo = jax.random.uniform(keys[6], (E, E), jnp.float32, -scale, scale)
    bo = jax.random.uniform(keys[7], (E,), jnp.float32, -scale, scale)
    return (wq, bq, wk, bk, wv, bv, wo, bo)


def attention_ref(q, k, v, params):
    """Pure-JAX f32 reference mirroring the PyTorch forward."""
    wq, bq, wk, bk, wv, bv, wo, bo = params
    E = q.shape[-1]
    qp = q @ wq.T + bq
    kp = k @ wk.T + bk
    vp = v @ wv.T + bv
    attn = jnp.einsum("bqe,bke->bqk", qp, kp) / math.sqrt(E)
    attn = jax.nn.softmax(attn, axis=-1)
    out = jnp.einsum("bqk,bke->bqe", attn, vp)
    return out @ wo.T + bo


if __name__ == "__main__":
    B, Nq, Nk, E = 2, 8, 8, 32
    num_heads = 4  # unused by the PyTorch forward (it never splits heads)

    key = jax.random.PRNGKey(0)
    kq, kk, kv, kparam = jax.random.split(key, 4)
    q = jax.random.normal(kq, (B, Nq, E), jnp.float32)
    k = jax.random.normal(kk, (B, Nk, E), jnp.float32)
    v = jax.random.normal(kv, (B, Nk, E), jnp.float32)
    params = init_params(kparam, E)

    out = attention_pallas(q, k, v, params)
    jax.block_until_ready(out)

    ref = attention_ref(q, k, v, params)
    assert out.shape == (B, Nq, E)
    max_err = float(jnp.max(jnp.abs(out - ref)))
    # bf16 MXU operands + approx reciprocal => looser tolerance than pure f32.
    assert jnp.allclose(out, ref, atol=5e-2, rtol=5e-2), (
        f"mismatch vs reference (max abs err {max_err})")

    print("KERNEL_OK")
</pallas_src>

<mosaic_0001>
module attributes {stable_mosaic.version = 11 : i64} {
  func.func @_fused_attn_kernel(%arg0: i32, %arg1: i32, %arg2: memref<1x8x128xbf16, #tpu.memory_space<vmem>>, %arg3: memref<1x8x128xbf16, #tpu.memory_space<vmem>>, %arg4: memref<1x8x128xbf16, #tpu.memory_space<vmem>>, %arg5: memref<128x128xbf16, #tpu.memory_space<vmem>>, %arg6: memref<128x128xbf16, #tpu.memory_space<vmem>>, %arg7: memref<128x128xbf16, #tpu.memory_space<vmem>>, %arg8: memref<128x128xbf16, #tpu.memory_space<vmem>>, %arg9: memref<1x128xf32, #tpu.memory_space<vmem>>, %arg10: memref<1x128xf32, #tpu.memory_space<vmem>>, %arg11: memref<1x128xf32, #tpu.memory_space<vmem>>, %arg12: memref<1x128xf32, #tpu.memory_space<vmem>>, %arg13: memref<1x8x128xf32, #tpu.memory_space<vmem>>, %arg14: memref<8x128xbf16, #tpu.memory_space<vmem>>, %arg15: memref<8x128xbf16, #tpu.memory_space<vmem>>) attributes {dimension_semantics = [#tpu.dimension_semantics<parallel>, #tpu.dimension_semantics<arbitrary>], iteration_bounds = array<i64: 2, 1>, scalar_prefetch = 0 : i64, scratch_operands = 2 : i64, tpu.core_type = #tpu.core_type<tc>, window_params = [{transform_indices = @transform_0, window_bounds = array<i64: 1, 8, 128>}, {transform_indices = @transform_1, window_bounds = array<i64: 1, 8, 128>}, {transform_indices = @transform_2, window_bounds = array<i64: 1, 8, 128>}, {pipeline_mode = #tpu.pipeline_mode<synchronous>, transform_indices = @transform_3, window_bounds = array<i64: 128, 128>}, {pipeline_mode = #tpu.pipeline_mode<synchronous>, transform_indices = @transform_4, window_bounds = array<i64: 128, 128>}, {pipeline_mode = #tpu.pipeline_mode<synchronous>, transform_indices = @transform_5, window_bounds = array<i64: 128, 128>}, {pipeline_mode = #tpu.pipeline_mode<synchronous>, transform_indices = @transform_6, window_bounds = array<i64: 128, 128>}, {pipeline_mode = #tpu.pipeline_mode<synchronous>, transform_indices = @transform_7, window_bounds = array<i64: 1, 128>}, {pipeline_mode = #tpu.pipeline_mode<synchronous>, transform_indices = @transform_8, window_bounds = array<i64: 1, 128>}, {pipeline_mode = #tpu.pipeline_mode<synchronous>, transform_indices = @transform_9, window_bounds = array<i64: 1, 128>}, {pipeline_mode = #tpu.pipeline_mode<synchronous>, transform_indices = @transform_10, window_bounds = array<i64: 1, 128>}, {transform_indices = @transform_11, window_bounds = array<i64: 1, 8, 128>}]} {
    %c0_i32 = arith.constant 0 : i32
    %0 = arith.cmpi eq, %arg1, %c0_i32 : i32
    %1 = arith.extui %0 : i1 to i32
    %c0_i32_0 = arith.constant 0 : i32
    %2 = arith.cmpi ne, %1, %c0_i32_0 : i32
    scf.if %2 {
      %c0_23 = arith.constant 0 : index
      %c0_24 = arith.constant 0 : index
      %c0_25 = arith.constant 0 : index
      %35 = vector.load %arg3[%c0_23, %c0_24, %c0_25] : memref<1x8x128xbf16, #tpu.memory_space<vmem>>, vector<1x8x128xbf16>
      %36 = vector.shape_cast %35 : vector<1x8x128xbf16> to vector<8x128xbf16>
      %c0_26 = arith.constant 0 : index
      %c0_27 = arith.constant 0 : index
      %c0_28 = arith.constant 0 : index
      %37 = vector.load %arg4[%c0_26, %c0_27, %c0_28] : memref<1x8x128xbf16, #tpu.memory_space<vmem>>, vector<1x8x128xbf16>
      %38 = vector.shape_cast %37 : vector<1x8x128xbf16> to vector<8x128xbf16>
      %c0_29 = arith.constant 0 : index
      %c0_30 = arith.constant 0 : index
      %39 = vector.load %arg6[%c0_29, %c0_30] : memref<128x128xbf16, #tpu.memory_space<vmem>>, vector<128x128xbf16>
      %cst_31 = arith.constant dense<0.000000e+00> : vector<8x128xf32>
      %40 = tpu.matmul %36, %39, %cst_31 {dimension_numbers = #tpu.dot_dimension_numbers<[1], [0], [0], [1], [0, 0, 1, 1], [], []>} : vector<8x128xbf16>, vector<128x128xbf16>, vector<8x128xf32> -> vector<8x128xf32>
      %c0_32 = arith.constant 0 : index
      %c0_33 = arith.constant 0 : index
      %41 = vector.load %arg10[%c0_32, %c0_33] : memref<1x128xf32, #tpu.memory_space<vmem>>, vector<1x128xf32>
      %42 = vector.broadcast %41 : vector<1x128xf32> to vector<8x128xf32>
      %43 = arith.addf %40, %42 : vector<8x128xf32>
      %c0_34 = arith.constant 0 : index
      %c0_35 = arith.constant 0 : index
      %44 = vector.load %arg7[%c0_34, %c0_35] : memref<128x128xbf16, #tpu.memory_space<vmem>>, vector<128x128xbf16>
      %cst_36 = arith.constant dense<0.000000e+00> : vector<8x128xf32>
      %45 = tpu.matmul %38, %44, %cst_36 {dimension_numbers = #tpu.dot_dimension_numbers<[1], [0], [0], [1], [0, 0, 1, 1], [], []>} : vector<8x128xbf16>, vector<128x128xbf16>, vector<8x128xf32> -> vector<8x128xf32>
      %c0_37 = arith.constant 0 : index
      %c0_38 = arith.constant 0 : index
      %46 = vector.load %arg11[%c0_37, %c0_38] : memref<1x128xf32, #tpu.memory_space<vmem>>, vector<1x128xf32>
      %47 = vector.broadcast %46 : vector<1x128xf32> to vector<8x128xf32>
      %48 = arith.addf %45, %47 : vector<8x128xf32>
      %49 = arith.truncf %43 : vector<8x128xf32> to vector<8x128xbf16>
      %c0_39 = arith.constant 0 : index
      %c0_40 = arith.constant 0 : index
      %50 = vector.load %arg14[%c0_39, %c0_40] : memref<8x128xbf16, #tpu.memory_space<vmem>>, vector<8x128xbf16>
      tpu.vector_store %arg14[%c0_39, %c0_40], %49 {strides = array<i32>} : memref<8x128xbf16, #tpu.memory_space<vmem>>, vector<8x128xbf16>,
      %51 = arith.truncf %48 : vector<8x128xf32> to vector<8x128xbf16>
      %c0_41 = arith.constant 0 : index
      %c0_42 = arith.constant 0 : index
      %52 = vector.load %arg15[%c0_41, %c0_42] : memref<8x128xbf16, #tpu.memory_space<vmem>>, vector<8x128xbf16>
      tpu.vector_store %arg15[%c0_41, %c0_42], %51 {strides = array<i32>} : memref<8x128xbf16, #tpu.memory_space<vmem>>, vector<8x128xbf16>,
    } else {
    }
    %c0 = arith.constant 0 : index
    %c0_1 = arith.constant 0 : index
    %c0_2 = arith.constant 0 : index
    %3 = vector.load %arg2[%c0, %c0_1, %c0_2] : memref<1x8x128xbf16, #tpu.memory_space<vmem>>, vector<1x8x128xbf16>
    %4 = vector.shape_cast %3 : vector<1x8x128xbf16> to vector<8x128xbf16>
    %c0_3 = arith.constant 0 : index
    %c0_4 = arith.constant 0 : index
    %5 = vector.load %arg5[%c0_3, %c0_4] : memref<128x128xbf16, #tpu.memory_space<vmem>>, vector<128x128xbf16>
    %cst = arith.constant dense<0.000000e+00> : vector<8x128xf32>
    %6 = tpu.matmul %4, %5, %cst {dimension_numbers = #tpu.dot_dimension_numbers<[1], [0], [0], [1], [0, 0, 1, 1], [], []>} : vector<8x128xbf16>, vector<128x128xbf16>, vector<8x128xf32> -> vector<8x128xf32>
    %c0_5 = arith.constant 0 : index
    %c0_6 = arith.constant 0 : index
    %7 = vector.load %arg9[%c0_5, %c0_6] : memref<1x128xf32, #tpu.memory_space<vmem>>, vector<1x128xf32>
    %8 = vector.broadcast %7 : vector<1x128xf32> to vector<8x128xf32>
    %9 = arith.addf %6, %8 : vector<8x128xf32>
    %10 = arith.truncf %9 : vector<8x128xf32> to vector<8x128xbf16>
    %c0_7 = arith.constant 0 : index
    %c0_8 = arith.constant 0 : index
    %11 = vector.load %arg14[%c0_7, %c0_8] : memref<8x128xbf16, #tpu.memory_space<vmem>>, vector<8x128xbf16>
    %cst_9 = arith.constant dense<0.000000e+00> : vector<8x8xf32>
    %12 = tpu.matmul %10, %11, %cst_9 {dimension_numbers = #tpu.dot_dimension_numbers<[1], [1], [0], [0], [0, 0, 1, 0], [], []>} : vector<8x128xbf16>, vector<8x128xbf16>, vector<8x8xf32> -> vector<8x8xf32>
    %cst_10 = arith.constant dense<0xFF800000> : vector<8xf32>
    %13 = vector.multi_reduction <maximumf>, %12, %cst_10 [1] : vector<8x8xf32> to vector<8xf32>
    %14 = vector.shape_cast %13 : vector<8xf32> to vector<8x1xf32>
    %15 = vector.broadcast %14 : vector<8x1xf32> to vector<8x8xf32>
    %16 = arith.subf %12, %15 : vector<8x8xf32>
    %17 = math.exp %16 : vector<8x8xf32>
    %cst_11 = arith.constant dense<0.000000e+00> : vector<8xf32>
    %18 = vector.multi_reduction <add>, %17, %cst_11 [1] : vector<8x8xf32> to vector<8xf32>
    %19 = vector.shape_cast %18 : vector<8xf32> to vector<8x1xf32>
    %20 = tpu.reciprocal %19 {approx = true} : vector<8x1xf32> -> vector<8x1xf32>
    %21 = vector.broadcast %20 : vector<8x1xf32> to vector<8x8xf32>
    %22 = arith.mulf %17, %21 : vector<8x8xf32>
    %23 = arith.truncf %22 : vector<8x8xf32> to vector<8x8xbf16>
    %c0_12 = arith.constant 0 : index
    %c0_13 = arith.constant 0 : index
    %24 = vector.load %arg15[%c0_12, %c0_13] : memref<8x128xbf16, #tpu.memory_space<vmem>>, vector<8x128xbf16>
    %cst_14 = arith.constant dense<0.000000e+00> : vector<8x128xf32>
    %25 = tpu.matmul %23, %24, %cst_14 {dimension_numbers = #tpu.dot_dimension_numbers<[1], [0], [0], [1], [0, 0, 1, 1], [], []>} : vector<8x8xbf16>, vector<8x128xbf16>, vector<8x128xf32> -> vector<8x128xf32>
    %26 = arith.truncf %25 : vector<8x128xf32> to vector<8x128xbf16>
    %c0_15 = arith.constant 0 : index
    %c0_16 = arith.constant 0 : index
    %27 = vector.load %arg8[%c0_15, %c0_16] : memref<128x128xbf16, #tpu.memory_space<vmem>>, vector<128x128xbf16>
    %cst_17 = arith.constant dense<0.000000e+00> : vector<8x128xf32>
    %28 = tpu.matmul %26, %27, %cst_17 {dimension_numbers = #tpu.dot_dimension_numbers<[1], [0], [0], [1], [0, 0, 1, 1], [], []>} : vector<8x128xbf16>, vector<128x128xbf16>, vector<8x128xf32> -> vector<8x128xf32>
    %c0_18 = arith.constant 0 : index
    %c0_19 = arith.constant 0 : index
    %29 = vector.load %arg12[%c0_18, %c0_19] : memref<1x128xf32, #tpu.memory_space<vmem>>, vector<1x128xf32>
    %30 = vector.broadcast %29 : vector<1x128xf32> to vector<8x128xf32>
    %31 = arith.addf %28, %30 : vector<8x128xf32>
    %c0_20 = arith.constant 0 : index
    %c0_21 = arith.constant 0 : index
    %c0_22 = arith.constant 0 : index
    %32 = vector.load %arg13[%c0_20, %c0_21, %c0_22] : memref<1x8x128xf32, #tpu.memory_space<vmem>>, vector<1x8x128xf32>
    %33 = vector.shape_cast %32 : vector<1x8x128xf32> to vector<8x128xf32>
    %34 = vector.shape_cast %31 : vector<8x128xf32> to vector<1x8x128xf32>
    tpu.vector_store %arg13[%c0_20, %c0_21, %c0_22], %34 {strides = array<i32>} : memref<1x8x128xf32, #tpu.memory_space<vmem>>, vector<1x8x128xf32>,
    return
  }
  func.func @transform_0(%arg0: i32, %arg1: i32) -> (i32, i32, i32) {
    %c0_i32 = arith.constant 0 : i32
    %c0_i32_0 = arith.constant 0 : i32
    return %arg0, %arg1, %c0_i32 : i32, i32, i32
  }
  func.func @transform_1(%arg0: i32, %arg1: i32) -> (i32, i32, i32) {
    %c0_i32 = arith.constant 0 : i32
    %c0_i32_0 = arith.constant 0 : i32
    %c0_i32_1 = arith.constant 0 : i32
    return %arg0, %c0_i32, %c0_i32_0 : i32, i32, i32
  }
  func.func @transform_2(%arg0: i32, %arg1: i32) -> (i32, i32, i32) {
    %c0_i32 = arith.constant 0 : i32
    %c0_i32_0 = arith.constant 0 : i32
    %c0_i32_1 = arith.constant 0 : i32
    return %arg0, %c0_i32, %c0_i32_0 : i32, i32, i32
  }
  func.func @transform_3(%arg0: i32, %arg1: i32) -> (i32, i32) {
    %c0_i32 = arith.constant 0 : i32
    %c0_i32_0 = arith.constant 0 : i32
    %c0_i32_1 = arith.constant 0 : i32
    return %c0_i32, %c0_i32_0 : i32, i32
  }
  func.func @transform_4(%arg0: i32, %arg1: i32) -> (i32, i32) {
    %c0_i32 = arith.constant 0 : i32
    %c0_i32_0 = arith.constant 0 : i32
    %c0_i32_1 = arith.constant 0 : i32
    return %c0_i32, %c0_i32_0 : i32, i32
  }
  func.func @transform_5(%arg0: i32, %arg1: i32) -> (i32, i32) {
    %c0_i32 = arith.constant 0 : i32
    %c0_i32_0 = arith.constant 0 : i32
    %c0_i32_1 = arith.constant 0 : i32
    return %c0_i32, %c0_i32_0 : i32, i32
  }
  func.func @transform_6(%arg0: i32, %arg1: i32) -> (i32, i32) {
    %c0_i32 = arith.constant 0 : i32
    %c0_i32_0 = arith.constant 0 : i32
    %c0_i32_1 = arith.constant 0 : i32
    return %c0_i32, %c0_i32_0 : i32, i32
  }
  func.func @transform_7(%arg0: i32, %arg1: i32) -> (i32, i32) {
    %c0_i32 = arith.constant 0 : i32
    %c0_i32_0 = arith.constant 0 : i32
    %c0_i32_1 = arith.constant 0 : i32
    return %c0_i32, %c0_i32_0 : i32, i32
  }
  func.func @transform_8(%arg0: i32, %arg1: i32) -> (i32, i32) {
    %c0_i32 = arith.constant 0 : i32
    %c0_i32_0 = arith.constant 0 : i32
    %c0_i32_1 = arith.constant 0 : i32
    return %c0_i32, %c0_i32_0 : i32, i32
  }
  func.func @transform_9(%arg0: i32, %arg1: i32) -> (i32, i32) {
    %c0_i32 = arith.constant 0 : i32
    %c0_i32_0 = arith.constant 0 : i32
    %c0_i32_1 = arith.constant 0 : i32
    return %c0_i32, %c0_i32_0 : i32, i32
  }
  func.func @transform_10(%arg0: i32, %arg1: i32) -> (i32, i32) {
    %c0_i32 = arith.constant 0 : i32
    %c0_i32_0 = arith.constant 0 : i32
    %c0_i32_1 = arith.constant 0 : i32
    return %c0_i32, %c0_i32_0 : i32, i32
  }
  func.func @transform_11(%arg0: i32, %arg1: i32) -> (i32, i32, i32) {
    %c0_i32 = arith.constant 0 : i32
    %c0_i32_0 = arith.constant 0 : i32
    return %arg0, %arg1, %c0_i32 : i32, i32, i32
  }
}

</mosaic_0001>

<llo_original>
// kernel: tpu_custom_call.1
$region0: #{tpu_custom_call.1}
  #allocation0 [shape = 'u32[]', space=smem, size = 0x4, offset = 0x4, fixed_abs, tag = 'smem constant byte address 0x4 - core index']
  #allocation1 [shape = 'u32[144,128]{1,0:T(1,128)}', space=vmem, size = 0x12000, scoped, tag = 'internal scratch']
  #allocation2 [shape = 'bf16[8,128]{1,0:T(8,128)(2,1)}', space=vmem, size = 0x800, scoped, tag = 'scratch operand']
  #allocation3 [shape = 'bf16[8,128]{1,0:T(8,128)(2,1)}', space=vmem, size = 0x800, scoped, tag = 'scratch operand']
  %s0 = inlined_call_operand.hbm [shape: bf16[2,8,128], index: 0, kind: input, shape index: {}]
  %s1 = inlined_call_operand.hbm [shape: bf16[2,8,128], index: 1, kind: input, shape index: {}]
  %s2 = inlined_call_operand.hbm [shape: bf16[2,8,128], index: 2, kind: input, shape index: {}]
  %s3 = inlined_call_operand.hbm [shape: bf16[128,128], index: 3, kind: input, shape index: {}]
  %s4 = inlined_call_operand.hbm [shape: bf16[128,128], index: 4, kind: input, shape index: {}]
  %s5 = inlined_call_operand.hbm [shape: bf16[128,128], index: 5, kind: input, shape index: {}]
  %s6 = inlined_call_operand.hbm [shape: bf16[128,128], index: 6, kind: input, shape index: {}]
  %s7 = inlined_call_operand.vmem [shape: f32[1,128], index: 7, kind: input, shape index: {}]
  %s8 = inlined_call_operand.vmem [shape: f32[1,128], index: 8, kind: input, shape index: {}]
  %s9 = inlined_call_operand.vmem [shape: f32[1,128], index: 9, kind: input, shape index: {}]
  %s10 = inlined_call_operand.vmem [shape: f32[1,128], index: 10, kind: input, shape index: {}]
  %s11 = inlined_call_operand.hbm [shape: f32[2,8,128], index: 11, kind: output, shape index: {}]
  %s12 = sld [smem:[#allocation0]]
  $region109: #{tpu_custom_call.1} parent=0
    _
  %s14 = ssub.s32 1, %s12
  %s15 = scalar_select 0, %s14, %s12
  $region1: #{tpu_custom_call.1} parent=0
    #allocation4 [shape = 'u8[4096]{0}', space=vmem, size = 0x1000, scoped, tag = 'input window, operand 0']
    #allocation5 [shape = 's32[2]{0}', space=sflag, size = 0x8, scoped, tag = 'scoped memory for tpu_custom_call.1']
    #allocation6 [shape = 's32[2]{0}', space=sflag, size = 0x8, scoped, tag = 'scoped memory for tpu_custom_call.1']
    #allocation7 [shape = 'u8[4096]{0}', space=vmem, size = 0x1000, scoped, tag = 'input window, operand 1']
    #allocation8 [shape = 's32[2]{0}', space=sflag, size = 0x8, scoped, tag = 'scoped memory for tpu_custom_call.1']
    #allocation9 [shape = 'u8[4096]{0}', space=vmem, size = 0x1000, scoped, tag = 'input window, operand 2']
    #allocation10 [shape = 'u8[32768]{0}', space=vmem, size = 0x8000, scoped, tag = 'input window, operand 3, single buffered']
    #allocation11 [shape = 's32[1]{0}', space=sflag, size = 0x4, scoped, tag = 'scoped memory for tpu_custom_call.1']
    #allocation12 [shape = 'u8[32768]{0}', space=vmem, size = 0x8000, scoped, tag = 'input window, operand 4, single buffered']
    #allocation13 [shape = 'u8[32768]{0}', space=vmem, size = 0x8000, scoped, tag = 'input window, operand 5, single buffered']
    #allocation14 [shape = 's32[1]{0}', space=sflag, size = 0x4, scoped, tag = 'scoped memory for tpu_custom_call.1']
    #allocation15 [shape = 'u8[32768]{0}', space=vmem, size = 0x8000, scoped, tag = 'input window, operand 6, single buffered']
    #allocation16 [shape = 'u8[8192]{0}', space=vmem, size = 0x2000, scoped, tag = 'output window, operand 0']
    %16 = vsyncpa [#allocation5], 0
    %s17 = scalar_lea.sflag [#allocation5], 1
    %18 = vsyncpa %s17, 0
    %19 = vsyncpa [#allocation8], 0
    %s20 = scalar_lea.sflag [#allocation8], 1
    %21 = vsyncpa %s20, 0
    %22 = vsyncpa [#allocation11], 0
    %23 = vsyncpa [#allocation14], 0
    %24 = vsyncpa [#allocation6], 0
    %s25 = scalar_lea.sflag [#allocation6], 1
    %26 = vsyncpa %s25, 0
    loop: start=0, step=1, limit=4
    $region2: #{tpu_custom_call.1} parent=1 // loop_pre_header
      _
    $region3: #{tpu_custom_call.1} parent=1 // loop_header
      %s28 = sphi 0, %s32
      %p29 = scmp.ge.s32.totalorder %s28, 4
      %s35 = sphi 0, %s47
      %s36 = sphi 0, %s43
      %s37 = sphi 0, %s35
      %s38 = sphi 0, %s36
      %s39 = sphi 0, %s37
      %s40 = sphi 0, %s38
      %s52 = sphi 0, %s54
      %s55 = sphi 0, %s52
      %s56 = sphi 0, %s55
      %s72 = sphi 0, %s56
      %s78 = sphi 0, %s80
      %s81 = sphi 0, %s78
      %s82 = sphi 0, %s81
      %s98 = sphi 0, %s82
      %s104 = sphi 0, %s106
      %s107 = sphi 0, %s104
      %s108 = sphi 0, %s107
      %s124 = sphi 0, %s108
      %s128 = sphi 0, %s128
      %s130 = sphi 0, %s128
      %s131 = sphi 0, %s130
      %s145 = sphi 0, %s131
      %s149 = sphi 0, %s149
      %s151 = sphi 0, %s149
      %s152 = sphi 0, %s151
      %s166 = sphi 0, %s152
      %s170 = sphi 0, %s170
      %s172 = sphi 0, %s170
      %s173 = sphi 0, %s172
      %s187 = sphi 0, %s173
      %s191 = sphi 0, %s191
      %s193 = sphi 0, %s191
      %s194 = sphi 0, %s193
      %s208 = sphi 0, %s194
      %s212 = sphi 0, %s212
      %s214 = sphi 0, %s212
      %s215 = sphi 0, %s214
      %s229 = sphi 0, %s215
      %s233 = sphi 0, %s233
      %s235 = sphi 0, %s233
      %s236 = sphi 0, %s235
      %s250 = sphi 0, %s236
      %s254 = sphi 0, %s254
      %s256 = sphi 0, %s254
      %s257 = sphi 0, %s256
      %s271 = sphi 0, %s257
      %s275 = sphi 0, %s275
      %s277 = sphi 0, %s275
      %s278 = sphi 0, %s277
      %s292 = sphi 0, %s278
      %s300 = sphi 0, %s302
      %s303 = sphi 0, %s300
      %s304 = sphi 0, %s303
      %s320 = sphi 0, %s304
    $region4: #{tpu_custom_call.1} parent=1 // loop_header_branch
      %31 = sbr.rel (%p29) target = $region8
    $region5: #{tpu_custom_call.1} parent=1 // loop_body
      %s33 = ssub.s32 %s28, 1
      %s34 = ssub.s32 %s28, 2
      %s41 = sadd.s32 1, %s36
      %p42 = scmp.ge.s32.totalorder %s41, 1
      %s43 = scalar_select %p42, 0, %s41
      %s44 = sadd.s32 1, %s35
      %s45 = scalar_select %p42, %s44, %s35
      %p46 = scmp.ge.s32.totalorder %s45, 2
      %s47 = scalar_select %p46, 0, %s45
      %s48 = ssub.s32 %s35, %s47
      %s49 = ssub.s32 %s36, %s43
      %s50 = sor.u32 %s48, %s49
      %p51 = scmp.eq.s32.totalorder %s50, 0
      %s53 = sadd.s32 %s52, 1
      %s54 = scalar_select %p51, %s52, %s53
      %p57 = pneg %p51
      %p58 = scmp.eq.s32.totalorder %s28, 1
      %p59 = por %p57, %p58
      %p60 = scmp.ne.s32.totalorder %s52, %s55
      %p61 = scmp.eq.s32.totalorder %s28, 0
      %p62 = por %p60, %p61
      %p63 = scmp.ne.s32.totalorder %s52, %s55
      %p64 = scmp.eq.s32.totalorder %s33, 1
      %p65 = por %p63, %p64
      %p66 = scmp.ne.s32.totalorder %s55, %s56
      %p67 = scmp.eq.s32.totalorder %s33, 0
      %p68 = por %p66, %p67
      %p69 = scmp.ne.s32.totalorder %s55, %s56
      %p70 = scmp.eq.s32.totalorder %s34, 1
      %p71 = por %p69, %p70
      %p73 = scmp.ne.s32.totalorder %s56, %s72
      %p74 = scmp.eq.s32.totalorder %s34, 0
      %p75 = por %p73, %p74
      %s76 = ssub.s32 %s35, %s47
      %p77 = scmp.eq.s32.totalorder %s76, 0
      %s79 = sadd.s32 %s78, 1
      %s80 = scalar_select %p77, %s78, %s79
      %p83 = pneg %p77
      %p84 = scmp.eq.s32.totalorder %s28, 1
      %p85 = por %p83, %p84
      %p86 = scmp.ne.s32.totalorder %s78, %s81
      %p87 = scmp.eq.s32.totalorder %s28, 0
      %p88 = por %p86, %p87
      %p89 = scmp.ne.s32.totalorder %s78, %s81
      %p90 = scmp.eq.s32.totalorder %s33, 1
      %p91 = por %p89, %p90
      %p92 = scmp.ne.s32.totalorder %s81, %s82
      %p93 = scmp.eq.s32.totalorder %s33, 0
      %p94 = por %p92, %p93
      %p95 = scmp.ne.s32.totalorder %s81, %s82
      %p96 = scmp.eq.s32.totalorder %s34, 1
      %p97 = por %p95, %p96
      %p99 = scmp.ne.s32.totalorder %s82, %s98
      %p100 = scmp.eq.s32.totalorder %s34, 0
      %p101 = por %p99, %p100
      %s102 = ssub.s32 %s35, %s47
      %p103 = scmp.eq.s32.totalorder %s102, 0
      %s105 = sadd.s32 %s104, 1
      %s106 = scalar_select %p103, %s104, %s105
      %p109 = pneg %p103
      %p110 = scmp.eq.s32.totalorder %s28, 1
      %p111 = por %p109, %p110
      %p112 = scmp.ne.s32.totalorder %s104, %s107
      %p113 = scmp.eq.s32.totalorder %s28, 0
      %p114 = por %p112, %p113
      %p115 = scmp.ne.s32.totalorder %s104, %s107
      %p116 = scmp.eq.s32.totalorder %s33, 1
      %p117 = por %p115, %p116
      %p118 = scmp.ne.s32.totalorder %s107, %s108
      %p119 = scmp.eq.s32.totalorder %s33, 0
      %p120 = por %p118, %p119
      %p121 = scmp.ne.s32.totalorder %s107, %s108
      %p122 = scmp.eq.s32.totalorder %s34, 1
      %p123 = por %p121, %p122
      %p125 = scmp.ne.s32.totalorder %s108, %s124
      %p126 = scmp.eq.s32.totalorder %s34, 0
      %p127 = por %p125, %p126
      %s129 = sadd.s32 %s128, 1
      %p132 = scmp.eq.s32.totalorder %s28, 1
      %p133 = scmp.ne.s32.totalorder %s128, %s130
      %p134 = scmp.eq.s32.totalorder %s28, 0
      %p135 = por %p133, %p134
      %p136 = scmp.ne.s32.totalorder %s128, %s130
      %p137 = scmp.eq.s32.totalorder %s33, 1
      %p138 = por %p136, %p137
      %p139 = scmp.ne.s32.totalorder %s130, %s131
      %p140 = scmp.eq.s32.totalorder %s33, 0
      %p141 = por %p139, %p140
      %p142 = scmp.ne.s32.totalorder %s130, %s131
      %p143 = scmp.eq.s32.totalorder %s34, 1
      %p144 = por %p142, %p143
      %p146 = scmp.ne.s32.totalorder %s131, %s145
      %p147 = scmp.eq.s32.totalorder %s34, 0
      %p148 = por %p146, %p147
      %s150 = sadd.s32 %s149, 1
      %p153 = scmp.eq.s32.totalorder %s28, 1
      %p154 = scmp.ne.s32.totalorder %s149, %s151
      %p155 = scmp.eq.s32.totalorder %s28, 0
      %p156 = por %p154, %p155
      %p157 = scmp.ne.s32.totalorder %s149, %s151
      %p158 = scmp.eq.s32.totalorder %s33, 1
      %p159 = por %p157, %p158
      %p160 = scmp.ne.s32.totalorder %s151, %s152
      %p161 = scmp.eq.s32.totalorder %s33, 0
      %p162 = por %p160, %p161
      %p163 = scmp.ne.s32.totalorder %s151, %s152
      %p164 = scmp.eq.s32.totalorder %s34, 1
      %p165 = por %p163, %p164
      %p167 = scmp.ne.s32.totalorder %s152, %s166
      %p168 = scmp.eq.s32.totalorder %s34, 0
      %p169 = por %p167, %p168
      %s171 = sadd.s32 %s170, 1
      %p174 = scmp.eq.s32.totalorder %s28, 1
      %p175 = scmp.ne.s32.totalorder %s170, %s172
      %p176 = scmp.eq.s32.totalorder %s28, 0
      %p177 = por %p175, %p176
      %p178 = scmp.ne.s32.totalorder %s170, %s172
      %p179 = scmp.eq.s32.totalorder %s33, 1
      %p180 = por %p178, %p179
      %p181 = scmp.ne.s32.totalorder %s172, %s173
      %p182 = scmp.eq.s32.totalorder %s33, 0
      %p183 = por %p181, %p182
      %p184 = scmp.ne.s32.totalorder %s172, %s173
      %p185 = scmp.eq.s32.totalorder %s34, 1
      %p186 = por %p184, %p185
      %p188 = scmp.ne.s32.totalorder %s173, %s187
      %p189 = scmp.eq.s32.totalorder %s34, 0
      %p190 = por %p188, %p189
      %s192 = sadd.s32 %s191, 1
      %p195 = scmp.eq.s32.totalorder %s28, 1
      %p196 = scmp.ne.s32.totalorder %s191, %s193
      %p197 = scmp.eq.s32.totalorder %s28, 0
      %p198 = por %p196, %p197
      %p199 = scmp.ne.s32.totalorder %s191, %s193
      %p200 = scmp.eq.s32.totalorder %s33, 1
      %p201 = por %p199, %p200
      %p202 = scmp.ne.s32.totalorder %s193, %s194
      %p203 = scmp.eq.s32.totalorder %s33, 0
      %p204 = por %p202, %p203
      %p205 = scmp.ne.s32.totalorder %s193, %s194
      %p206 = scmp.eq.s32.totalorder %s34, 1
      %p207 = por %p205, %p206
      %p209 = scmp.ne.s32.totalorder %s194, %s208
      %p210 = scmp.eq.s32.totalorder %s34, 0
      %p211 = por %p209, %p210
      %s213 = sadd.s32 %s212, 1
      %p216 = scmp.eq.s32.totalorder %s28, 1
      %p217 = scmp.ne.s32.totalorder %s212, %s214
      %p218 = scmp.eq.s32.totalorder %s28, 0
      %p219 = por %p217, %p218
      %p220 = scmp.ne.s32.totalorder %s212, %s214
      %p221 = scmp.eq.s32.totalorder %s33, 1
      %p222 = por %p220, %p221
      %p223 = scmp.ne.s32.totalorder %s214, %s215
      %p224 = scmp.eq.s32.totalorder %s33, 0
      %p225 = por %p223, %p224
      %p226 = scmp.ne.s32.totalorder %s214, %s215
      %p227 = scmp.eq.s32.totalorder %s34, 1
      %p228 = por %p226, %p227
      %p230 = scmp.ne.s32.totalorder %s215, %s229
      %p231 = scmp.eq.s32.totalorder %s34, 0
      %p232 = por %p230, %p231
      %s234 = sadd.s32 %s233, 1
      %p237 = scmp.eq.s32.totalorder %s28, 1
      %p238 = scmp.ne.s32.totalorder %s233, %s235
      %p239 = scmp.eq.s32.totalorder %s28, 0
      %p240 = por %p238, %p239
      %p241 = scmp.ne.s32.totalorder %s233, %s235
      %p242 = scmp.eq.s32.totalorder %s33, 1
      %p243 = por %p241, %p242
      %p244 = scmp.ne.s32.totalorder %s235, %s236
      %p245 = scmp.eq.s32.totalorder %s33, 0
      %p246 = por %p244, %p245
      %p247 = scmp.ne.s32.totalorder %s235, %s236
      %p248 = scmp.eq.s32.totalorder %s34, 1
      %p249 = por %p247, %p248
      %p251 = scmp.ne.s32.totalorder %s236, %s250
      %p252 = scmp.eq.s32.totalorder %s34, 0
      %p253 = por %p251, %p252
      %s255 = sadd.s32 %s254, 1
      %p258 = scmp.eq.s32.totalorder %s28, 1
      %p259 = scmp.ne.s32.totalorder %s254, %s256
      %p260 = scmp.eq.s32.totalorder %s28, 0
      %p261 = por %p259, %p260
      %p262 = scmp.ne.s32.totalorder %s254, %s256
      %p263 = scmp.eq.s32.totalorder %s33, 1
      %p264 = por %p262, %p263
      %p265 = scmp.ne.s32.totalorder %s256, %s257
      %p266 = scmp.eq.s32.totalorder %s33, 0
      %p267 = por %p265, %p266
      %p268 = scmp.ne.s32.totalorder %s256, %s257
      %p269 = scmp.eq.s32.totalorder %s34, 1
      %p270 = por %p268, %p269
      %p272 = scmp.ne.s32.totalorder %s257, %s271
      %p273 = scmp.eq.s32.totalorder %s34, 0
      %p274 = por %p272, %p273
      %s276 = sadd.s32 %s275, 1
      %p279 = scmp.eq.s32.totalorder %s28, 1
      %p280 = scmp.ne.s32.totalorder %s275, %s277
      %p281 = scmp.eq.s32.totalorder %s28, 0
      %p282 = por %p280, %p281
      %p283 = scmp.ne.s32.totalorder %s275, %s277
      %p284 = scmp.eq.s32.totalorder %s33, 1
      %p285 = por %p283, %p284
      %p286 = scmp.ne.s32.totalorder %s277, %s278
      %p287 = scmp.eq.s32.totalorder %s33, 0
      %p288 = por %p286, %p287
      %p289 = scmp.ne.s32.totalorder %s277, %s278
      %p290 = scmp.eq.s32.totalorder %s34, 1
      %p291 = por %p289, %p290
      %p293 = scmp.ne.s32.totalorder %s278, %s292
      %p294 = scmp.eq.s32.totalorder %s34, 0
      %p295 = por %p293, %p294
      %s296 = ssub.s32 %s35, %s47
      %s297 = ssub.s32 %s36, %s43
      %s298 = sor.u32 %s296, %s297
      %p299 = scmp.eq.s32.totalorder %s298, 0
      %s301 = sadd.s32 %s300, 1
      %s302 = scalar_select %p299, %s300, %s301
      %p305 = pneg %p299
      %p306 = scmp.eq.s32.totalorder %s28, 1
      %p307 = por %p305, %p306
      %p308 = scmp.ne.s32.totalorder %s300, %s303
      %p309 = scmp.eq.s32.totalorder %s28, 0
      %p310 = por %p308, %p309
      %p311 = scmp.ne.s32.totalorder %s300, %s303
      %p312 = scmp.eq.s32.totalorder %s33, 1
      %p313 = por %p311, %p312
      %p314 = scmp.ne.s32.totalorder %s303, %s304
      %p315 = scmp.eq.s32.totalorder %s33, 0
      %p316 = por %p314, %p315
      %p317 = scmp.ne.s32.totalorder %s303, %s304
      %p318 = scmp.eq.s32.totalorder %s34, 1
      %p319 = por %p317, %p318
      %p321 = scmp.ne.s32.totalorder %s304, %s320
      %p322 = scmp.eq.s32.totalorder %s34, 0
      %p323 = por %p321, %p322
      %p324 = scmp.le.s32.totalorder 1, %s28
      %p325 = scmp.lt.s32.totalorder %s28, 3
      %p326 = pnand %p324, %p325
      %p327 = pneg %p326
      // Predicated region
      $region9: #{tpu_custom_call.1} parent=5 // pred_check
        _
      $region10: #{tpu_custom_call.1} parent=5 // pred_check_branch
        %329 = sbr.rel (%p326) target = $region12
      $region11: #{tpu_custom_call.1} parent=5 // pred_region
        %s330 = ssub.s32 %s28, 1
        // Predicated region
        $region13: #{tpu_custom_call.1} parent=11 // pred_check
          %p331 = pneg %p141
        $region14: #{tpu_custom_call.1} parent=11 // pred_check_branch
          %333 = sbr.rel (%p331) target = $region16
        $region15: #{tpu_custom_call.1} parent=11 // pred_region
          %s335 = ssub.s32 1024, 1024
          %336 = vsyncadd [#allocation11], %s335
          %s337 = sshll.u32 [#allocation10], 4
          %s338 = int_to_ptr.vmem [resolvable:$true] %s337
          %343 = dma.hbm_to_vmem [thread:$0]  %s3, 1024, %s338, [#allocation11], 64, 64, 4
        $region16: #{tpu_custom_call.1} parent=11 // pred_fallthru
          _
        // Predicated region
        $region17: #{tpu_custom_call.1} parent=11 // pred_check
          %p344 = pneg %p162
        $region18: #{tpu_custom_call.1} parent=11 // pred_check_branch
          %346 = sbr.rel (%p344) target = $region20
        $region19: #{tpu_custom_call.1} parent=11 // pred_region
          %s348 = ssub.s32 1024, 1024
          %349 = vsyncadd [#allocation11], %s348
          %s350 = sshll.u32 [#allocation12], 4
          %s351 = int_to_ptr.vmem [resolvable:$true] %s350
          %356 = dma.hbm_to_vmem [thread:$0]  %s4, 1024, %s351, [#allocation11], 64, 64, 4
        $region20: #{tpu_custom_call.1} parent=11 // pred_fallthru
          _
        // Predicated region
        $region21: #{tpu_custom_call.1} parent=11 // pred_check
          %p357 = pneg %p183
        $region22: #{tpu_custom_call.1} parent=11 // pred_check_branch
          %359 = sbr.rel (%p357) target = $region24
        $region23: #{tpu_custom_call.1} parent=11 // pred_region
          %s361 = ssub.s32 1024, 1024
          %362 = vsyncadd [#allocation14], %s361
          %s363 = sshll.u32 [#allocation13], 4
          %s364 = int_to_ptr.vmem [resolvable:$true] %s363
          %369 = dma.hbm_to_vmem [thread:$0]  %s5, 1024, %s364, [#allocation14], 64, 64, 4
        $region24: #{tpu_custom_call.1} parent=11 // pred_fallthru
          _
        // Predicated region
        $region25: #{tpu_custom_call.1} parent=11 // pred_check
          %p370 = pneg %p204
        $region26: #{tpu_custom_call.1} parent=11 // pred_check_branch
          %372 = sbr.rel (%p370) target = $region28
        $region27: #{tpu_custom_call.1} parent=11 // pred_region
          %s374 = ssub.s32 1024, 1024
          %375 = vsyncadd [#allocation14], %s374
          %s376 = sshll.u32 [#allocation15], 4
          %s377 = int_to_ptr.vmem [resolvable:$true] %s376
          %382 = dma.hbm_to_vmem [thread:$0]  %s6, 1024, %s377, [#allocation14], 64, 64, 4
        $region28: #{tpu_custom_call.1} parent=11 // pred_fallthru
          _
        // Predicated region
        $region29: #{tpu_custom_call.1} parent=11 // pred_check
          %p383 = pneg %p225
        $region30: #{tpu_custom_call.1} parent=11 // pred_check_branch
          %385 = sbr.rel (%p383) target = $region32
        $region31: #{tpu_custom_call.1} parent=11 // pred_region
          _
        $region32: #{tpu_custom_call.1} parent=11 // pred_fallthru
          _
        // Predicated region
        $region33: #{tpu_custom_call.1} parent=11 // pred_check
          %p386 = pneg %p246
        $region34: #{tpu_custom_call.1} parent=11 // pred_check_branch
          %388 = sbr.rel (%p386) target = $region36
        $region35: #{tpu_custom_call.1} parent=11 // pred_region
          _
        $region36: #{tpu_custom_call.1} parent=11 // pred_fallthru
          _
        // Predicated region
        $region37: #{tpu_custom_call.1} parent=11 // pred_check
          %p389 = pneg %p267
        $region38: #{tpu_custom_call.1} parent=11 // pred_check_branch
          %391 = sbr.rel (%p389) target = $region40
        $region39: #{tpu_custom_call.1} parent=11 // pred_region
          _
        $region40: #{tpu_custom_call.1} parent=11 // pred_fallthru
          _
        // Predicated region
        $region41: #{tpu_custom_call.1} parent=11 // pred_check
          %p392 = pneg %p288
        $region42: #{tpu_custom_call.1} parent=11 // pred_check_branch
          %394 = sbr.rel (%p392) target = $region44
        $region43: #{tpu_custom_call.1} parent=11 // pred_region
          _
        $region44: #{tpu_custom_call.1} parent=11 // pred_fallthru
          _
      $region12: #{tpu_custom_call.1} parent=5 // pred_fallthru
        _
      %p395 = scmp.lt.s32.totalorder %s28, 2
      // Predicated region
      $region45: #{tpu_custom_call.1} parent=5 // pred_check
        %p396 = pneg %p395
      $region46: #{tpu_custom_call.1} parent=5 // pred_check_branch
        %398 = sbr.rel (%p396) target = $region48
      $region47: #{tpu_custom_call.1} parent=5 // pred_region
        // Predicated region
        $region49: #{tpu_custom_call.1} parent=47 // pred_check
          %p399 = pneg %p62
        $region50: #{tpu_custom_call.1} parent=47 // pred_check_branch
          %401 = sbr.rel (%p399) target = $region52
        $region51: #{tpu_custom_call.1} parent=47 // pred_region
          %s402 = sand.u32 %s52, 1
          %s403 = scalar_lea.sflag [#allocation5], %s402
          %s404 = sand.u32 %s52, 1
          %s405 = smul.addr %s404, 4
          %s406 = scalar_lea.vmem [#allocation4], %s405
          %s408 = ssub.s32 64, 64
          %409 = vsyncadd %s403, %s408
          %s410 = sadd.s32 %s36, %s35
          %s411 = smul.addr %s410, 64
          %s412 = scalar_lea.hbm %s0, %s411
          %s414 = sshll.u32 %s406, 4
          %s415 = int_to_ptr.vmem [resolvable:$true] %s414
          %417 = dma.hbm_to_vmem [thread:$0]  %s412, 64, %s415, %s403
        $region52: #{tpu_custom_call.1} parent=47 // pred_fallthru
          _
        // Predicated region
        $region53: #{tpu_custom_call.1} parent=47 // pred_check
          %p418 = pneg %p88
        $region54: #{tpu_custom_call.1} parent=47 // pred_check_branch
          %420 = sbr.rel (%p418) target = $region56
        $region55: #{tpu_custom_call.1} parent=47 // pred_region
          %s421 = sand.u32 %s28, 1
          %s422 = scalar_lea.sflag [#allocation8], %s421
          %s423 = sand.u32 %s78, 1
          %s424 = smul.addr %s423, 4
          %s425 = scalar_lea.vmem [#allocation7], %s424
          %s427 = ssub.s32 64, 64
          %428 = vsyncadd %s422, %s427
          %s429 = smul.addr %s35, 64
          %s430 = scalar_lea.hbm %s1, %s429
          %s432 = sshll.u32 %s425, 4
          %s433 = int_to_ptr.vmem [resolvable:$true] %s432
          %435 = dma.hbm_to_vmem [thread:$0]  %s430, 64, %s433, %s422
        $region56: #{tpu_custom_call.1} parent=47 // pred_fallthru
          _
        // Predicated region
        $region57: #{tpu_custom_call.1} parent=47 // pred_check
          %p436 = pneg %p114
        $region58: #{tpu_custom_call.1} parent=47 // pred_check_branch
          %438 = sbr.rel (%p436) target = $region60
        $region59: #{tpu_custom_call.1} parent=47 // pred_region
          %s439 = sand.u32 %s28, 1
          %s440 = scalar_lea.sflag [#allocation8], %s439
          %s441 = sand.u32 %s104, 1
          %s442 = smul.addr %s441, 4
          %s443 = scalar_lea.vmem [#allocation9], %s442
          %s445 = ssub.s32 64, 64
          %446 = vsyncadd %s440, %s445
          %s447 = smul.addr %s35, 64
          %s448 = scalar_lea.hbm %s2, %s447
          %s450 = sshll.u32 %s443, 4
          %s451 = int_to_ptr.vmem [resolvable:$true] %s450
          %453 = dma.hbm_to_vmem [thread:$0]  %s448, 64, %s451, %s440
        $region60: #{tpu_custom_call.1} parent=47 // pred_fallthru
          _
      $region48: #{tpu_custom_call.1} parent=5 // pred_fallthru
        _
      %p454 = scmp.le.s32.totalorder 1, %s28
      %p455 = scmp.lt.s32.totalorder %s28, 3
      %p456 = pnand %p454, %p455
      %p457 = pneg %p456
      // Predicated region
      $region61: #{tpu_custom_call.1} parent=5 // pred_check
        _
      $region62: #{tpu_custom_call.1} parent=5 // pred_check_branch
        %459 = sbr.rel (%p456) target = $region64
      $region63: #{tpu_custom_call.1} parent=5 // pred_region
        %s460 = ssub.s32 %s28, 1
        %s461 = sand.u32 %s55, 1
        %s462 = scalar_lea.sflag [#allocation5], %s461
        %s463 = sand.u32 %s55, 1
        %s464 = smul.addr %s463, 4
        %s465 = scalar_lea.vmem [#allocation4], %s464
        // Predicated region
        $region65: #{tpu_custom_call.1} parent=63 // pred_check
          %p466 = pneg %p68
        $region66: #{tpu_custom_call.1} parent=63 // pred_check_branch
          %468 = sbr.rel (%p466) target = $region68
        $region67: #{tpu_custom_call.1} parent=63 // pred_region
          %469 = dma.done %s462, 64
        $region68: #{tpu_custom_call.1} parent=63 // pred_fallthru
          _
        %s470 = sand.u32 %s33, 1
        %s471 = scalar_lea.sflag [#allocation8], %s470
        %s472 = sand.u32 %s81, 1
        %s473 = smul.addr %s472, 4
        %s474 = scalar_lea.vmem [#allocation7], %s473
        // Predicated region
        $region69: #{tpu_custom_call.1} parent=63 // pred_check
          %p475 = pneg %p94
        $region70: #{tpu_custom_call.1} parent=63 // pred_check_branch
          %477 = sbr.rel (%p475) target = $region72
        $region71: #{tpu_custom_call.1} parent=63 // pred_region
          %478 = dma.done %s471, 64
        $region72: #{tpu_custom_call.1} parent=63 // pred_fallthru
          _
        %s479 = sand.u32 %s33, 1
        %s480 = scalar_lea.sflag [#allocation8], %s479
        %s481 = sand.u32 %s107, 1
        %s482 = smul.addr %s481, 4
        %s483 = scalar_lea.vmem [#allocation9], %s482
        // Predicated region
        $region73: #{tpu_custom_call.1} parent=63 // pred_check
          %p484 = pneg %p120
        $region74: #{tpu_custom_call.1} parent=63 // pred_check_branch
          %486 = sbr.rel (%p484) target = $region76
        $region75: #{tpu_custom_call.1} parent=63 // pred_region
          %487 = dma.done %s480, 64
        $region76: #{tpu_custom_call.1} parent=63 // pred_fallthru
          _
        // Predicated region
        $region77: #{tpu_custom_call.1} parent=63 // pred_check
          %p488 = pneg %p141
        $region78: #{tpu_custom_call.1} parent=63 // pred_check_branch
          %490 = sbr.rel (%p488) target = $region80
        $region79: #{tpu_custom_call.1} parent=63 // pred_region
          %491 = dma.done [#allocation11], 1024
        $region80: #{tpu_custom_call.1} parent=63 // pred_fallthru
          _
        // Predicated region
        $region81: #{tpu_custom_call.1} parent=63 // pred_check
          %p492 = pneg %p162
        $region82: #{tpu_custom_call.1} parent=63 // pred_check_branch
          %494 = sbr.rel (%p492) target = $region84
        $region83: #{tpu_custom_call.1} parent=63 // pred_region
          %495 = dma.done [#allocation11], 1024
        $region84: #{tpu_custom_call.1} parent=63 // pred_fallthru
          _
        // Predicated region
        $region85: #{tpu_custom_call.1} parent=63 // pred_check
          %p496 = pneg %p183
        $region86: #{tpu_custom_call.1} parent=63 // pred_check_branch
          %498 = sbr.rel (%p496) target = $region88
        $region87: #{tpu_custom_call.1} parent=63 // pred_region
          %499 = dma.done [#allocation14], 1024
        $region88: #{tpu_custom_call.1} parent=63 // pred_fallthru
          _
        // Predicated region
        $region89: #{tpu_custom_call.1} parent=63 // pred_check
          %p500 = pneg %p204
        $region90: #{tpu_custom_call.1} parent=63 // pred_check_branch
          %502 = sbr.rel (%p500) target = $region92
        $region91: #{tpu_custom_call.1} parent=63 // pred_region
          %503 = dma.done [#allocation14], 1024
        $region92: #{tpu_custom_call.1} parent=63 // pred_fallthru
          _
        %s504 = sand.u32 %s55, 1
        %s505 = scalar_lea.sflag [#allocation5], %s504
        %s506 = sand.u32 %s55, 1
        %s507 = smul.addr %s506, 4
        %s508 = scalar_lea.vmem [#allocation4], %s507
        %p509 = pneg %p68
        %p510 = pneg %p65
        %s511 = sand.u32 %s33, 1
        %s512 = scalar_lea.sflag [#allocation8], %s511
        %s513 = sand.u32 %s81, 1
        %s514 = smul.addr %s513, 4
        %s515 = scalar_lea.vmem [#allocation7], %s514
        %p516 = pneg %p94
        %p517 = pneg %p91
        %s518 = sand.u32 %s33, 1
        %s519 = scalar_lea.sflag [#allocation8], %s518
        %s520 = sand.u32 %s107, 1
        %s521 = smul.addr %s520, 4
        %s522 = scalar_lea.vmem [#allocation9], %s521
        %p523 = pneg %p120
        %p524 = pneg %p117
        %p525 = pneg %p141
        %p526 = pneg %p138
        %p527 = pneg %p162
        %p528 = pneg %p159
        %p529 = pneg %p183
        %p530 = pneg %p180
        %p531 = pneg %p204
        %p532 = pneg %p201
        %p533 = pneg %p225
        %p534 = pneg %p222
        %p535 = pneg %p246
        %p536 = pneg %p243
        %p537 = pneg %p267
        %p538 = pneg %p264
        %p539 = pneg %p288
        %p540 = pneg %p285
        %p541 = pneg %p316
        %p542 = pneg %p313
        %s543 = sand.u32 %s303, 1
        %s544 = scalar_lea.sflag [#allocation6], %s543
        %s545 = sand.u32 %s303, 1
        %s546 = smul.addr %s545, 8
        %s547 = scalar_lea.vmem [#allocation16], %s546
        %p549 = scmp.eq.s32.totalorder %s38, 0
        // Predicated region
        $region93: #{tpu_custom_call.1} parent=63 // pred_check
          %p550 = pneg %p549
        $region94: #{tpu_custom_call.1} parent=63 // pred_check_branch
          %552 = sbr.rel (%p550) target = $region96
        $region95: #{tpu_custom_call.1} parent=63 // pred_region
          %v553 = vld [vmem:[%s474] sm:$0xf]
          %v554 = vld [vmem:[%s483] sm:$0xf]
          %v555 = vld [vmem:[#allocation12] sm:$0xf]
          %v556 = vld [vmem:[#allocation12 + $0x4] sm:$0xf]
          %v557 = vld [vmem:[#allocation12 + $0x8] sm:$0xf]
          %v558 = vld [vmem:[#allocation12 + $0xc] sm:$0xf]
          %v559 = vld [vmem:[#allocation12 + $0x10] sm:$0xf]
          %v560 = vld [vmem:[#allocation12 + $0x14] sm:$0xf]
          %v561 = vld [vmem:[#allocation12 + $0x18] sm:$0xf]
          %v562 = vld [vmem:[#allocation12 + $0x1c] sm:$0xf]
          %v563 = vld [vmem:[#allocation12 + $0x20] sm:$0xf]
          %v564 = vld [vmem:[#allocation12 + $0x24] sm:$0xf]
          %v565 = vld [vmem:[#allocation12 + $0x28] sm:$0xf]
          %v566 = vld [vmem:[#allocation12 + $0x2c] sm:$0xf]
          %v567 = vld [vmem:[#allocation12 + $0x30] sm:$0xf]
          %v568 = vld [vmem:[#allocation12 + $0x34] sm:$0xf]
          %v569 = vld [vmem:[#allocation12 + $0x38] sm:$0xf]
          %v570 = vld [vmem:[#allocation12 + $0x3c] sm:$0xf]
          %v571 = vld [vmem:[%s8] sm:$0x1]
          %v573 = vlaneseq
          %v574 = vshrl.u32 %v573, 7
          %v575 = vsub.s32 0, %v574
          %v576 = vrot.slane %v571, %v575
          %v594 = vunpack.c.l.b16 %v555
          %v595 = vunpack.c.l.b16 %v556
          %v596 = vunpack.c.l.b16 %v557
          %v597 = vunpack.c.l.b16 %v558
          %v598 = vunpack.c.l.b16 %v559
          %v599 = vunpack.c.l.b16 %v560
          %v600 = vunpack.c.l.b16 %v561
          %v601 = vunpack.c.l.b16 %v562
          %v602 = vunpack.c.l.b16 %v563
          %v603 = vunpack.c.l.b16 %v564
          %v604 = vunpack.c.l.b16 %v565
          %v605 = vunpack.c.l.b16 %v566
          %v606 = vunpack.c.l.b16 %v567
          %v607 = vunpack.c.l.b16 %v568
          %v608 = vunpack.c.l.b16 %v569
          %v609 = vunpack.c.l.b16 %v570
          %v610 = vpack.c.b16 %v595, %v594
          %v611 = vpack.c.b16 %v597, %v596
          %v612 = vpack.c.b16 %v599, %v598
          %v613 = vpack.c.b16 %v601, %v600
          %v614 = vpack.c.b16 %v603, %v602
          %v615 = vpack.c.b16 %v605, %v604
          %v616 = vpack.c.b16 %v607, %v606
          %v617 = vpack.c.b16 %v609, %v608
          %626 = vmatprep.subr.bf16.mxu0 0
          %627 = vmatpush1.bf16.msra.mxu0 %v610
          %628 = vmatprep.subr.bf16.mxu0 0
          %629 = vmatpush1.bf16.msra.mxu0 %v611
          %630 = vmatprep.subr.bf16.mxu0 0
          %631 = vmatpush1.bf16.msra.mxu0 %v612
          %632 = vmatprep.subr.bf16.mxu0 0
          %633 = vmatpush1.bf16.msra.mxu0 %v613
          %634 = vmatprep.subr.bf16.mxu0 0
          %635 = vmatpush1.bf16.msra.mxu0 %v614
          %636 = vmatprep.subr.bf16.mxu0 0
          %637 = vmatpush1.bf16.msra.mxu0 %v615
          %638 = vmatprep.subr.bf16.mxu0 0
          %639 = vmatpush1.bf16.msra.mxu0 %v616
          %640 = vmatprep.subr.bf16.mxu0 0
          %641 = vmatpush1.bf16.msra.mxu0 %v617
          %642 = vmatprep.subr.bf16.mxu0 0
          %643 = vmatpush1.bf16.msra.mxu0 0
          %644 = vmatprep.subr.bf16.mxu0 0
          %645 = vmatpush1.bf16.msra.mxu0 0
          %646 = vmatprep.subr.bf16.mxu0 0
          %647 = vmatpush1.bf16.msra.mxu0 0
          %648 = vmatprep.subr.bf16.mxu0 0
          %649 = vmatpush1.bf16.msra.mxu0 0
          %650 = vmatprep.subr.bf16.mxu0 0
          %651 = vmatpush1.bf16.msra.mxu0 0
          %652 = vmatprep.subr.bf16.mxu0 0
          %653 = vmatpush1.bf16.msra.mxu0 0
          %654 = vmatprep.subr.bf16.mxu0 0
          %655 = vmatpush1.bf16.msra.mxu0 0
          %656 = vmatprep.subr.bf16.mxu0 0
          %657 = vmatpush1.bf16.msra.mxu0 0
          %658 = vmatprep.mubr.bf16.mxu0 0
          %659 = vmatmul.mubr.bf16.gmra.mrb[0].mxu0 %v553
          %v660 = vpop.f32.mrb[0].mxu0
          %v661 = vadd.f32 %v576, %v660
          %v662 = vpop.f32.mrb[0].mxu0
          %v663 = vpop.f32.mrb[0].mxu0
          %v664 = vpop.f32.mrb[0].mxu0
          %665 = vdwg.mxu0
          %v666 = vld [vmem:[#allocation13] sm:$0xf]
          %v667 = vld [vmem:[#allocation13 + $0x4] sm:$0xf]
          %v668 = vld [vmem:[#allocation13 + $0x8] sm:$0xf]
          %v669 = vld [vmem:[#allocation13 + $0xc] sm:$0xf]
          %v670 = vld [vmem:[#allocation13 + $0x10] sm:$0xf]
          %v671 = vld [vmem:[#allocation13 + $0x14] sm:$0xf]
          %v672 = vld [vmem:[#allocation13 + $0x18] sm:$0xf]
          %v673 = vld [vmem:[#allocation13 + $0x1c] sm:$0xf]
          %v674 = vld [vmem:[#allocation13 + $0x20] sm:$0xf]
          %v675 = vld [vmem:[#allocation13 + $0x24] sm:$0xf]
          %v676 = vld [vmem:[#allocation13 + $0x28] sm:$0xf]
          %v677 = vld [vmem:[#allocation13 + $0x2c] sm:$0xf]
          %v678 = vld [vmem:[#allocation13 + $0x30] sm:$0xf]
          %v679 = vld [vmem:[#allocation13 + $0x34] sm:$0xf]
          %v680 = vld [vmem:[#allocation13 + $0x38] sm:$0xf]
          %v681 = vld [vmem:[#allocation13 + $0x3c] sm:$0xf]
          %v682 = vld [vmem:[%s9] sm:$0x1]
          %v684 = vlaneseq
          %v685 = vshrl.u32 %v684, 7
          %v686 = vsub.s32 0, %v685
          %v687 = vrot.slane %v682, %v686
          %v705 = vunpack.c.l.b16 %v666
          %v706 = vunpack.c.l.b16 %v667
          %v707 = vunpack.c.l.b16 %v668
          %v708 = vunpack.c.l.b16 %v669
          %v709 = vunpack.c.l.b16 %v670
          %v710 = vunpack.c.l.b16 %v671
          %v711 = vunpack.c.l.b16 %v672
          %v712 = vunpack.c.l.b16 %v673
          %v713 = vunpack.c.l.b16 %v674
          %v714 = vunpack.c.l.b16 %v675
          %v715 = vunpack.c.l.b16 %v676
          %v716 = vunpack.c.l.b16 %v677
          %v717 = vunpack.c.l.b16 %v678
          %v718 = vunpack.c.l.b16 %v679
          %v719 = vunpack.c.l.b16 %v680
          %v720 = vunpack.c.l.b16 %v681
          %v721 = vpack.c.b16 %v706, %v705
          %v722 = vpack.c.b16 %v708, %v707
          %v723 = vpack.c.b16 %v710, %v709
          %v724 = vpack.c.b16 %v712, %v711
          %v725 = vpack.c.b16 %v714, %v713
          %v726 = vpack.c.b16 %v716, %v715
          %v727 = vpack.c.b16 %v718, %v717
          %v728 = vpack.c.b16 %v720, %v719
          %737 = vmatprep.subr.bf16.mxu0 0
          %738 = vmatpush1.bf16.msra.mxu0 %v721
          %739 = vmatprep.subr.bf16.mxu0 0
          %740 = vmatpush1.bf16.msra.mxu0 %v722
          %741 = vmatprep.subr.bf16.mxu0 0
          %742 = vmatpush1.bf16.msra.mxu0 %v723
          %743 = vmatprep.subr.bf16.mxu0 0
          %744 = vmatpush1.bf16.msra.mxu0 %v724
          %745 = vmatprep.subr.bf16.mxu0 0
          %746 = vmatpush1.bf16.msra.mxu0 %v725
          %747 = vmatprep.subr.bf16.mxu0 0
          %748 = vmatpush1.bf16.msra.mxu0 %v726
          %749 = vmatprep.subr.bf16.mxu0 0
          %750 = vmatpush1.bf16.msra.mxu0 %v727
          %751 = vmatprep.subr.bf16.mxu0 0
          %752 = vmatpush1.bf16.msra.mxu0 %v728
          %753 = vmatprep.subr.bf16.mxu0 0
          %754 = vmatpush1.bf16.msra.mxu0 0
          %755 = vmatprep.subr.bf16.mxu0 0
          %756 = vmatpush1.bf16.msra.mxu0 0
          %757 = vmatprep.subr.bf16.mxu0 0
          %758 = vmatpush1.bf16.msra.mxu0 0
          %759 = vmatprep.subr.bf16.mxu0 0
          %760 = vmatpush1.bf16.msra.mxu0 0
          %761 = vmatprep.subr.bf16.mxu0 0
          %762 = vmatpush1.bf16.msra.mxu0 0
          %763 = vmatprep.subr.bf16.mxu0 0
          %764 = vmatpush1.bf16.msra.mxu0 0
          %765 = vmatprep.subr.bf16.mxu0 0
          %766 = vmatpush1.bf16.msra.mxu0 0
          %767 = vmatprep.subr.bf16.mxu0 0
          %768 = vmatpush1.bf16.msra.mxu0 0
          %769 = vmatprep.mubr.bf16.mxu0 0
          %770 = vmatmul.mubr.bf16.gmra.mrb[0].mxu0 %v554
          %v771 = vpop.f32.mrb[0].mxu0
          %v772 = vadd.f32 %v687, %v771
          %v773 = vpop.f32.mrb[0].mxu0
          %v774 = vpop.f32.mrb[0].mxu0
          %v775 = vpop.f32.mrb[0].mxu0
          %776 = vdwg.mxu0
          %v777 = vpack.c.bf16 %v661, %v661
          %778 = vst [vmem:[#allocation2] sm:$0xf] %v777
          %v779 = vpack.c.bf16 %v772, %v772
          %780 = vst [vmem:[#allocation3] sm:$0xf] %v779
        $region96: #{tpu_custom_call.1} parent=63 // pred_fallthru
          _
        %v781 = vld [vmem:[%s465] sm:$0xf]
        %v782 = vld [vmem:[#allocation10] sm:$0xf]
        %v783 = vld [vmem:[#allocation10 + $0x4] sm:$0xf]
        %v784 = vld [vmem:[#allocation10 + $0x8] sm:$0xf]
        %v785 = vld [vmem:[#allocation10 + $0xc] sm:$0xf]
        %v786 = vld [vmem:[#allocation10 + $0x10] sm:$0xf]
        %v787 = vld [vmem:[#allocation10 + $0x14] sm:$0xf]
        %v788 = vld [vmem:[#allocation10 + $0x18] sm:$0xf]
        %v789 = vld [vmem:[#allocation10 + $0x1c] sm:$0xf]
        %v790 = vld [vmem:[#allocation10 + $0x20] sm:$0xf]
        %v791 = vld [vmem:[#allocation10 + $0x24] sm:$0xf]
        %v792 = vld [vmem:[#allocation10 + $0x28] sm:$0xf]
        %v793 = vld [vmem:[#allocation10 + $0x2c] sm:$0xf]
        %v794 = vld [vmem:[#allocation10 + $0x30] sm:$0xf]
        %v795 = vld [vmem:[#allocation10 + $0x34] sm:$0xf]
        %v796 = vld [vmem:[#allocation10 + $0x38] sm:$0xf]
        %v797 = vld [vmem:[#allocation10 + $0x3c] sm:$0xf]
        %v798 = vld [vmem:[%s7] sm:$0x1]
        %v800 = vlaneseq
        %v801 = vshrl.u32 %v800, 7
        %v802 = vsub.s32 0, %v801
        %v803 = vrot.slane %v798, %v802
        %v821 = vunpack.c.l.b16 %v782
        %v822 = vunpack.c.l.b16 %v783
        %v823 = vunpack.c.l.b16 %v784
        %v824 = vunpack.c.l.b16 %v785
        %v825 = vunpack.c.l.b16 %v786
        %v826 = vunpack.c.l.b16 %v787
        %v827 = vunpack.c.l.b16 %v788
        %v828 = vunpack.c.l.b16 %v789
        %v829 = vunpack.c.l.b16 %v790
        %v830 = vunpack.c.l.b16 %v791
        %v831 = vunpack.c.l.b16 %v792
        %v832 = vunpack.c.l.b16 %v793
        %v833 = vunpack.c.l.b16 %v794
        %v834 = vunpack.c.l.b16 %v795
        %v835 = vunpack.c.l.b16 %v796
        %v836 = vunpack.c.l.b16 %v797
        %v837 = vpack.c.b16 %v822, %v821
        %v838 = vpack.c.b16 %v824, %v823
        %v839 = vpack.c.b16 %v826, %v825
        %v840 = vpack.c.b16 %v828, %v827
        %v841 = vpack.c.b16 %v830, %v829
        %v842 = vpack.c.b16 %v832, %v831
        %v843 = vpack.c.b16 %v834, %v833
        %v844 = vpack.c.b16 %v836, %v835
        %853 = vmatprep.subr.bf16.mxu0 0
        %854 = vmatpush1.bf16.msra.mxu0 %v837
        %855 = vmatprep.subr.bf16.mxu0 0
        %856 = vmatpush1.bf16.msra.mxu0 %v838
        %857 = vmatprep.subr.bf16.mxu0 0
        %858 = vmatpush1.bf16.msra.mxu0 %v839
        %859 = vmatprep.subr.bf16.mxu0 0
        %860 = vmatpush1.bf16.msra.mxu0 %v840
        %861 = vmatprep.subr.bf16.mxu0 0
        %862 = vmatpush1.bf16.msra.mxu0 %v841
        %863 = vmatprep.subr.bf16.mxu0 0
        %864 = vmatpush1.bf16.msra.mxu0 %v842
        %865 = vmatprep.subr.bf16.mxu0 0
        %866 = vmatpush1.bf16.msra.mxu0 %v843
        %867 = vmatprep.subr.bf16.mxu0 0
        %868 = vmatpush1.bf16.msra.mxu0 %v844
        %869 = vmatprep.subr.bf16.mxu0 0
        %870 = vmatpush1.bf16.msra.mxu0 0
        %871 = vmatprep.subr.bf16.mxu0 0
        %872 = vmatpush1.bf16.msra.mxu0 0
        %873 = vmatprep.subr.bf16.mxu0 0
        %874 = vmatpush1.bf16.msra.mxu0 0
        %875 = vmatprep.subr.bf16.mxu0 0
        %876 = vmatpush1.bf16.msra.mxu0 0
        %877 = vmatprep.subr.bf16.mxu0 0
        %878 = vmatpush1.bf16.msra.mxu0 0
        %879 = vmatprep.subr.bf16.mxu0 0
        %880 = vmatpush1.bf16.msra.mxu0 0
        %881 = vmatprep.subr.bf16.mxu0 0
        %882 = vmatpush1.bf16.msra.mxu0 0
        %883 = vmatprep.subr.bf16.mxu0 0
        %884 = vmatpush1.bf16.msra.mxu0 0
        %885 = vmatprep.mubr.bf16.mxu0 0
        %886 = vmatmul.mubr.bf16.gmra.mrb[0].mxu0 %v781
        %v887 = vpop.f32.mrb[0].mxu0
        %v888 = vadd.f32 %v803, %v887
        %v889 = vpop.f32.mrb[0].mxu0
        %v890 = vpop.f32.mrb[0].mxu0
        %v891 = vpop.f32.mrb[0].mxu0
        %892 = vdwg.mxu0
        %v893 = vpack.c.bf16 %v888, %v888
        %v894 = vld [vmem:[#allocation2] sm:$0xf]
        %895 = vmatprep.subr.bf16.mxu0 0
        %896 = vmatpush1.bf16.xpose.msra.mxu0 %v894
        %897 = vmatprep.subr.bf16.mxu0 0
        %898 = vmatpush1.bf16.xpose.msra.mxu0 0
        %899 = vmatprep.subr.bf16.mxu0 0
        %900 = vmatpush1.bf16.xpose.msra.mxu0 0
        %901 = vmatprep.subr.bf16.mxu0 0
        %902 = vmatpush1.bf16.xpose.msra.mxu0 0
        %903 = vmatprep.subr.bf16.mxu0 0
        %904 = vmatpush1.bf16.xpose.msra.mxu0 0
        %905 = vmatprep.subr.bf16.mxu0 0
        %906 = vmatpush1.bf16.xpose.msra.mxu0 0
        %907 = vmatprep.subr.bf16.mxu0 0
        %908 = vmatpush1.bf16.xpose.msra.mxu0 0
        %909 = vmatprep.subr.bf16.mxu0 0
        %910 = vmatpush1.bf16.xpose.msra.mxu0 0
        %911 = vmatprep.subr.bf16.mxu0 0
        %912 = vmatpush1.bf16.xpose.msra.mxu0 0
        %913 = vmatprep.subr.bf16.mxu0 0
        %914 = vmatpush1.bf16.xpose.msra.mxu0 0
        %915 = vmatprep.subr.bf16.mxu0 0
        %916 = vmatpush1.bf16.xpose.msra.mxu0 0
        %917 = vmatprep.subr.bf16.mxu0 0
        %918 = vmatpush1.bf16.xpose.msra.mxu0 0
        %919 = vmatprep.subr.bf16.mxu0 0
        %920 = vmatpush1.bf16.xpose.msra.mxu0 0
        %921 = vmatprep.subr.bf16.mxu0 0
        %922 = vmatpush1.bf16.xpose.msra.mxu0 0
        %923 = vmatprep.subr.bf16.mxu0 0
        %924 = vmatpush1.bf16.xpose.msra.mxu0 0
        %925 = vmatprep.subr.bf16.mxu0 0
        %926 = vmatpush1.bf16.xpose.msra.mxu0 0
        %927 = vmatprep.mubr.bf16.mxu0 0
        %928 = vmatmul.mubr.bf16.gmra.mrb[0].mxu0 %v893
        %v929 = vpop.f32.mrb[0].mxu0
        %v930 = vadd.f32 0.0, %v929
        %v931 = vpop.f32.mrb[0].mxu0
        %v932 = vpop.f32.mrb[0].mxu0
        %v933 = vpop.f32.mrb[0].mxu0
        %934 = vdwg.mxu0
        %vm935 = vcmask 64512
        %v936 = vsel %vm935, %v930, -inf
        %937 = vmax.xlane.f32.xlu0 %v936
        %v938 = vpop.xlane.xlu0 %937
        %v939 = vsub.f32 %v930, %v938
        %v940 = vmul.f32 %v939, 1.442695
        %v941 = vpow.pop %v940
        %v942 = vsel %vm935, %v941, 0.0
        %943 = vadd.xlane.f32.xlu0 %v942
        %v944 = vpop.xlane.xlu0 %943
        %v945 = vrcp.pop %v944
        %v946 = vmul.f32 %v941, %v945
        %v947 = vpack.c.bf16 %v946, %v946
        %v948 = vld [vmem:[#allocation3] sm:$0xf]
        %v950 = vsel %vm935, %v947, 0
        %vm952 = vcmask 1043456
        %v954 = vsel %vm952, %v948, 0
        %956 = vmatprep.subr.bf16.mxu0 0
        %957 = vmatpush1.bf16.msra.mxu0 %v954
        %958 = vmatprep.subr.bf16.mxu0 0
        %959 = vmatpush1.bf16.msra.mxu0 0
        %960 = vmatprep.subr.bf16.mxu0 0
        %961 = vmatpush1.bf16.msra.mxu0 0
        %962 = vmatprep.subr.bf16.mxu0 0
        %963 = vmatpush1.bf16.msra.mxu0 0
        %964 = vmatprep.subr.bf16.mxu0 0
        %965 = vmatpush1.bf16.msra.mxu0 0
        %966 = vmatprep.subr.bf16.mxu0 0
        %967 = vmatpush1.bf16.msra.mxu0 0
        %968 = vmatprep.subr.bf16.mxu0 0
        %969 = vmatpush1.bf16.msra.mxu0 0
        %970 = vmatprep.subr.bf16.mxu0 0
        %971 = vmatpush1.bf16.msra.mxu0 0
        %972 = vmatprep.subr.bf16.mxu0 0
        %973 = vmatpush1.bf16.msra.mxu0 0
        %974 = vmatprep.subr.bf16.mxu0 0
        %975 = vmatpush1.bf16.msra.mxu0 0
        %976 = vmatprep.subr.bf16.mxu0 0
        %977 = vmatpush1.bf16.msra.mxu0 0
        %978 = vmatprep.subr.bf16.mxu0 0
        %979 = vmatpush1.bf16.msra.mxu0 0
        %980 = vmatprep.subr.bf16.mxu0 0
        %981 = vmatpush1.bf16.msra.mxu0 0
        %982 = vmatprep.subr.bf16.mxu0 0
        %983 = vmatpush1.bf16.msra.mxu0 0
        %984 = vmatprep.subr.bf16.mxu0 0
        %985 = vmatpush1.bf16.msra.mxu0 0
        %986 = vmatprep.subr.bf16.mxu0 0
        %987 = vmatpush1.bf16.msra.mxu0 0
        %988 = vmatprep.mubr.bf16.mxu0 0
        %989 = vmatmul.mubr.bf16.gmra.mrb[0].mxu0 %v950
        %v990 = vpop.f32.mrb[0].mxu0
        %v991 = vadd.f32 0.0, %v990
        %v992 = vpop.f32.mrb[0].mxu0
        %v993 = vpop.f32.mrb[0].mxu0
        %v994 = vpop.f32.mrb[0].mxu0
        %995 = vdwg.mxu0
        %v996 = vpack.c.bf16 %v991, %v991
        %v997 = vld [vmem:[#allocation15] sm:$0xf]
        %v998 = vld [vmem:[#allocation15 + $0x4] sm:$0xf]
        %v999 = vld [vmem:[#allocation15 + $0x8] sm:$0xf]
        %v1000 = vld [vmem:[#allocation15 + $0xc] sm:$0xf]
        %v1001 = vld [vmem:[#allocation15 + $0x10] sm:$0xf]
        %v1002 = vld [vmem:[#allocation15 + $0x14] sm:$0xf]
        %v1003 = vld [vmem:[#allocation15 + $0x18] sm:$0xf]
        %v1004 = vld [vmem:[#allocation15 + $0x1c] sm:$0xf]
        %v1005 = vld [vmem:[#allocation15 + $0x20] sm:$0xf]
        %v1006 = vld [vmem:[#allocation15 + $0x24] sm:$0xf]
        %v1007 = vld [vmem:[#allocation15 + $0x28] sm:$0xf]
        %v1008 = vld [vmem:[#allocation15 + $0x2c] sm:$0xf]
        %v1009 = vld [vmem:[#allocation15 + $0x30] sm:$0xf]
        %v1010 = vld [vmem:[#allocation15 + $0x34] sm:$0xf]
        %v1011 = vld [vmem:[#allocation15 + $0x38] sm:$0xf]
        %v1012 = vld [vmem:[#allocation15 + $0x3c] sm:$0xf]
        %v1013 = vld [vmem:[%s10] sm:$0x1]
        %v1015 = vlaneseq
        %v1016 = vshrl.u32 %v1015, 7
        %v1017 = vsub.s32 0, %v1016
        %v1018 = vrot.slane %v1013, %v1017
        %v1036 = vunpack.c.l.b16 %v997
        %v1037 = vunpack.c.l.b16 %v998
        %v1038 = vunpack.c.l.b16 %v999
        %v1039 = vunpack.c.l.b16 %v1000
        %v1040 = vunpack.c.l.b16 %v1001
        %v1041 = vunpack.c.l.b16 %v1002
        %v1042 = vunpack.c.l.b16 %v1003
        %v1043 = vunpack.c.l.b16 %v1004
        %v1044 = vunpack.c.l.b16 %v1005
        %v1045 = vunpack.c.l.b16 %v1006
        %v1046 = vunpack.c.l.b16 %v1007
        %v1047 = vunpack.c.l.b16 %v1008
        %v1048 = vunpack.c.l.b16 %v1009
        %v1049 = vunpack.c.l.b16 %v1010
        %v1050 = vunpack.c.l.b16 %v1011
        %v1051 = vunpack.c.l.b16 %v1012
        %v1052 = vpack.c.b16 %v1037, %v1036
        %v1053 = vpack.c.b16 %v1039, %v1038
        %v1054 = vpack.c.b16 %v1041, %v1040
        %v1055 = vpack.c.b16 %v1043, %v1042
        %v1056 = vpack.c.b16 %v1045, %v1044
        %v1057 = vpack.c.b16 %v1047, %v1046
        %v1058 = vpack.c.b16 %v1049, %v1048
        %v1059 = vpack.c.b16 %v1051, %v1050
        %1068 = vmatprep.subr.bf16.mxu0 0
        %1069 = vmatpush1.bf16.msra.mxu0 %v1052
        %1070 = vmatprep.subr.bf16.mxu0 0
        %1071 = vmatpush1.bf16.msra.mxu0 %v1053
        %1072 = vmatprep.subr.bf16.mxu0 0
        %1073 = vmatpush1.bf16.msra.mxu0 %v1054
        %1074 = vmatprep.subr.bf16.mxu0 0
        %1075 = vmatpush1.bf16.msra.mxu0 %v1055
        %1076 = vmatprep.subr.bf16.mxu0 0
        %1077 = vmatpush1.bf16.msra.mxu0 %v1056
        %1078 = vmatprep.subr.bf16.mxu0 0
        %1079 = vmatpush1.bf16.msra.mxu0 %v1057
        %1080 = vmatprep.subr.bf16.mxu0 0
        %1081 = vmatpush1.bf16.msra.mxu0 %v1058
        %1082 = vmatprep.subr.bf16.mxu0 0
        %1083 = vmatpush1.bf16.msra.mxu0 %v1059
        %1084 = vmatprep.subr.bf16.mxu0 0
        %1085 = vmatpush1.bf16.msra.mxu0 0
        %1086 = vmatprep.subr.bf16.mxu0 0
        %1087 = vmatpush1.bf16.msra.mxu0 0
        %1088 = vmatprep.subr.bf16.mxu0 0
        %1089 = vmatpush1.bf16.msra.mxu0 0
        %1090 = vmatprep.subr.bf16.mxu0 0
        %1091 = vmatpush1.bf16.msra.mxu0 0
        %1092 = vmatprep.subr.bf16.mxu0 0
        %1093 = vmatpush1.bf16.msra.mxu0 0
        %1094 = vmatprep.subr.bf16.mxu0 0
        %1095 = vmatpush1.bf16.msra.mxu0 0
        %1096 = vmatprep.subr.bf16.mxu0 0
        %1097 = vmatpush1.bf16.msra.mxu0 0
        %1098 = vmatprep.subr.bf16.mxu0 0
        %1099 = vmatpush1.bf16.msra.mxu0 0
        %1100 = vmatprep.mubr.bf16.mxu0 0
        %1101 = vmatmul.mubr.bf16.gmra.mrb[0].mxu0 %v996
        %v1102 = vpop.f32.mrb[0].mxu0
        %v1103 = vadd.f32 %v1018, %v1102
        %v1104 = vpop.f32.mrb[0].mxu0
        %v1105 = vpop.f32.mrb[0].mxu0
        %v1106 = vpop.f32.mrb[0].mxu0
        %1107 = vdwg.mxu0
        %1108 = vst [vmem:[%s547] sm:$0xff] %v1103
        %s1109 = sand.u32 %s303, 1
        %s1110 = scalar_lea.sflag [#allocation6], %s1109
        %s1111 = sand.u32 %s303, 1
        %s1112 = smul.addr %s1111, 8
        %s1113 = scalar_lea.vmem [#allocation16], %s1112
        // Predicated region
        $region97: #{tpu_custom_call.1} parent=63 // pred_check
          %p1114 = pneg %p313
        $region98: #{tpu_custom_call.1} parent=63 // pred_check_branch
          %1116 = sbr.rel (%p1114) target = $region100
        $region99: #{tpu_custom_call.1} parent=63 // pred_region
          %s1118 = ssub.s32 128, 128
          %1119 = vsyncadd %s1110, %s1118
          %s1120 = sadd.s32 %s38, %s37
          %s1121 = smul.addr %s1120, 128
          %s1122 = scalar_lea.hbm %s11, %s1121
          %s1124 = sshll.u32 %s1113, 4
          %s1125 = int_to_ptr.vmem [resolvable:$true] %s1124
          %1127 = dma.vmem_to_hbm [thread:$0]  %s1125, 128, %s1122, %s1110
        $region100: #{tpu_custom_call.1} parent=63 // pred_fallthru
          _
      $region64: #{tpu_custom_call.1} parent=5 // pred_fallthru
        _
      %p1128 = scmp.le.s32.totalorder 2, %s28
      // Predicated region
      $region101: #{tpu_custom_call.1} parent=5 // pred_check
        %p1129 = pneg %p1128
      $region102: #{tpu_custom_call.1} parent=5 // pred_check_branch
        %1131 = sbr.rel (%p1129) target = $region104
      $region103: #{tpu_custom_call.1} parent=5 // pred_region
        %s1132 = ssub.s32 %s28, 2
        // Predicated region
        $region105: #{tpu_custom_call.1} parent=103 // pred_check
          %p1133 = pneg %p319
        $region106: #{tpu_custom_call.1} parent=103 // pred_check_branch
          %1135 = sbr.rel (%p1133) target = $region108
        $region107: #{tpu_custom_call.1} parent=103 // pred_region
          %s1136 = sand.u32 %s304, 1
          %s1137 = scalar_lea.sflag [#allocation6], %s1136
          %s1138 = sand.u32 %s304, 1
          %s1139 = smul.addr %s1138, 8
          %s1140 = scalar_lea.vmem [#allocation16], %s1139
          %1141 = dma.done %s1137, 128
        $region108: #{tpu_custom_call.1} parent=103 // pred_fallthru
          _
      $region104: #{tpu_custom_call.1} parent=5 // pred_fallthru
        _
    $region6: #{tpu_custom_call.1} parent=1 // loop_footer
      %s32 = sadd.s32 1, %s28
    $region7: #{tpu_custom_call.1} parent=1 // loop_footer_branch
      %27 = sbr.rel target = $region3
    $region8: #{tpu_custom_call.1} parent=1 // loop_exit
      _
    %1142 = vsyncpa [#allocation5], 1
    %s1143 = scalar_lea.sflag [#allocation5], 1
    %1144 = vsyncpa %s1143, 1
    %1145 = vsyncpa [#allocation8], 1
    %s1146 = scalar_lea.sflag [#allocation8], 1
    %1147 = vsyncpa %s1146, 1
    %1148 = vsyncpa [#allocation11], 1
    %1149 = vsyncpa [#allocation14], 1
    %1150 = vsyncpa [#allocation6], 1
    %s1151 = scalar_lea.sflag [#allocation6], 1
    %1152 = vsyncpa %s1151, 1

</llo_original>
